<compile_context>
chip_gen: v5e
topology: v5e:2x2
jax: 0.10.0
libtpu: 0.0.40
codegen_flags: <defaults>
</compile_context>

<pallas_src>
import functools
import math

import jax
import jax.numpy as jnp
from jax.experimental import pallas as pl
from jax.experimental.pallas import tpu as pltpu


def _avgpool_kernel(x_ref, awt_ref, o_ref, *, pool):
    # x_ref:   (TC*H, W)   TC whole channels, rows stacked
    # awt_ref: (W, Wo)     column block-averaging matrix, entries 1/p^2
    # o_ref:   (TC*Ho, Wo)
    rows, _ = x_ref.shape
    wo = awt_ref.shape[1]
    x = x_ref[...].astype(jnp.float32)
    # Column pooling: one large-M MXU matmul (includes the full 1/p^2 scale).
    col = jnp.dot(x, awt_ref[...], preferred_element_type=jnp.float32)    # (TC*H, Wo)
    # Row pooling: group p consecutive rows (tile-aligned when p % 8 == 0).
    pooled = col.reshape(rows // pool, pool, wo).sum(axis=1)              # (TC*Ho, Wo)
    o_ref[...] = pooled.astype(o_ref.dtype)


def avg_pool2d_pallas(x, pooling_size, *, target_block_bytes=1 << 20):
    """Equivalent of nn.AvgPool2d(pooling_size) on NCHW input."""
    N, C, H, W = x.shape
    p = int(pooling_size)
    assert H % p == 0 and W % p == 0, "spatial dims must be divisible by pooling_size"
    Ho, Wo = H // p, W // p
    NC = N * C

    # --- choose how many whole channels each grid step processes -------------
    itemsize = jnp.dtype(x.dtype).itemsize
    plane_bytes = H * W * itemsize
    tc_fit = max(1, int(target_block_bytes // plane_bytes))
    if tc_fit >= NC:
        TC = NC                       # single grid step: full-extent blocks
    else:
        # When tiling, the sublane dims of the blocks must be multiples of 8.
        m = 8 // math.gcd(Ho, 8)
        TC = max(m, (tc_fit // m) * m)
        TC = min(TC, NC)
    G = (NC + TC - 1) // TC
    NC_pad = G * TC

    # --- layout plumbing (cheap XLA reshapes + optional zero pad) -------------
    x_flat = x.reshape(NC, H, W)
    if NC_pad != NC:
        x_flat = jnp.pad(x_flat, ((0, NC_pad - NC), (0, 0), (0, 0)))
    x_rows = x_flat.reshape(NC_pad * H, W)

    # Column averaging matrix with the full 1/p^2 scale baked in.
    awt = jnp.repeat(jnp.eye(Wo, dtype=jnp.float32), p, axis=0) / float(p * p)  # (W, Wo)

    out_rows = pl.pallas_call(
        functools.partial(_avgpool_kernel, pool=p),
        out_shape=jax.ShapeDtypeStruct((NC_pad * Ho, Wo), x.dtype),
        grid_spec=pltpu.PrefetchScalarGridSpec(
            num_scalar_prefetch=0,
            grid=(G,),
            in_specs=[
                pl.BlockSpec((TC * H, W), lambda i: (i, 0)),
                pl.BlockSpec((W, Wo), lambda i: (0, 0)),   # resident, never re-DMA'd
            ],
            out_specs=pl.BlockSpec((TC * Ho, Wo), lambda i: (i, 0)),
        ),
        compiler_params=pltpu.CompilerParams(
            dimension_semantics=("parallel",),
        ),
    )(x_rows, awt)

    out = out_rows.reshape(NC_pad, Ho, Wo)[:NC].reshape(N, C, Ho, Wo)
    return out


class CModelPallas:
    """Pallas equivalent of c_model: forward(x) = AvgPool2d(pooling_size)(x)."""

    def __init__(self, pooling_size=32):
        self.pooling_size = pooling_size

    def __call__(self, x):
        return avg_pool2d_pallas(x, self.pooling_size)


if __name__ == "__main__":
    key = jax.random.PRNGKey(0)
    # Small shapes consistent with the module (NCHW); pooling_size divides spatial.
    N, C, H, W = 2, 4, 32, 32
    pooling_size = 8
    x = jax.random.normal(key, (N, C, H, W), dtype=jnp.float32)

    model = CModelPallas(pooling_size=pooling_size)
    out = model(x)
    out = jax.block_until_ready(out)

    # Reference check (plain JAX average pooling).
    ref = x.reshape(N, C, H // pooling_size, pooling_size,
                    W // pooling_size, pooling_size).mean(axis=(3, 5))
    assert out.shape == (N, C, H // pooling_size, W // pooling_size)
    assert jnp.allclose(out, ref, atol=1e-5, rtol=1e-5)

    print("KERNEL_OK")
</pallas_src>

<mosaic_0001>
module attributes {stable_mosaic.version = 11 : i64} {
  func.func @_avgpool_kernel(%arg0: i32, %arg1: memref<256x32xf32, #tpu.memory_space<vmem>>, %arg2: memref<32x4xf32, #tpu.memory_space<vmem>>, %arg3: memref<32x4xf32, #tpu.memory_space<vmem>>) attributes {dimension_semantics = [#tpu.dimension_semantics<parallel>], iteration_bounds = array<i64: 1>, scalar_prefetch = 0 : i64, scratch_operands = 0 : i64, tpu.core_type = #tpu.core_type<tc>, window_params = [{transform_indices = @transform_0, window_bounds = array<i64: 256, 32>}, {pipeline_mode = #tpu.pipeline_mode<synchronous>, transform_indices = @transform_1, window_bounds = array<i64: 32, 4>}, {transform_indices = @transform_2, window_bounds = array<i64: 32, 4>}]} {
    %c0 = arith.constant 0 : index
    %c0_0 = arith.constant 0 : index
    %0 = vector.load %arg1[%c0, %c0_0] : memref<256x32xf32, #tpu.memory_space<vmem>>, vector<256x32xf32>
    %c0_1 = arith.constant 0 : index
    %c0_2 = arith.constant 0 : index
    %1 = vector.load %arg2[%c0_1, %c0_2] : memref<32x4xf32, #tpu.memory_space<vmem>>, vector<32x4xf32>
    %cst = arith.constant dense<0.000000e+00> : vector<256x4xf32>
    %2 = tpu.matmul %0, %1, %cst {dimension_numbers = #tpu.dot_dimension_numbers<[1], [0], [0], [1], [0, 0, 1, 1], [], []>} : vector<256x32xf32>, vector<32x4xf32>, vector<256x4xf32> -> vector<256x4xf32>
    %3 = vector.shape_cast %2 : vector<256x4xf32> to vector<32x8x4xf32>
    %cst_3 = arith.constant dense<0.000000e+00> : vector<32x4xf32>
    %4 = vector.multi_reduction <add>, %3, %cst_3 [1] : vector<32x8x4xf32> to vector<32x4xf32>
    %c0_4 = arith.constant 0 : index
    %c0_5 = arith.constant 0 : index
    %5 = vector.load %arg3[%c0_4, %c0_5] : memref<32x4xf32, #tpu.memory_space<vmem>>, vector<32x4xf32>
    tpu.vector_store %arg3[%c0_4, %c0_5], %4 {strides = array<i32>} : memref<32x4xf32, #tpu.memory_space<vmem>>, vector<32x4xf32>,
    return
  }
  func.func @transform_0(%arg0: i32) -> (i32, i32) {
    %c0_i32 = arith.constant 0 : i32
    %c0_i32_0 = arith.constant 0 : i32
    return %arg0, %c0_i32 : i32, i32
  }
  func.func @transform_1(%arg0: i32) -> (i32, i32) {
    %c0_i32 = arith.constant 0 : i32
    %c0_i32_0 = arith.constant 0 : i32
    %c0_i32_1 = arith.constant 0 : i32
    return %c0_i32, %c0_i32_0 : i32, i32
  }
  func.func @transform_2(%arg0: i32) -> (i32, i32) {
    %c0_i32 = arith.constant 0 : i32
    %c0_i32_0 = arith.constant 0 : i32
    return %arg0, %c0_i32 : i32, i32
  }
}

</mosaic_0001>

<llo_original>
// kernel: tpu_custom_call.1
$region0: #{tpu_custom_call.1}
  #allocation0 [shape = 'u32[]', space=smem, size = 0x4, offset = 0x4, fixed_abs, tag = 'smem constant byte address 0x4 - core index']
  #allocation1 [shape = 'u32[72,128]{1,0:T(1,128)}', space=vmem, size = 0x9000, scoped, tag = 'internal scratch']
  %s0 = inlined_call_operand.vmem [shape: f32[256,32], index: 0, kind: input, shape index: {}]
  %s1 = inlined_call_operand.vmem [shape: f32[32,4], index: 1, kind: input, shape index: {}]
  %s2 = inlined_call_operand.vmem [shape: f32[32,4], index: 2, kind: output, shape index: {}]
  %s3 = sld [smem:[#allocation0]]
  $region18: #{tpu_custom_call.1} parent=0
    _
  %s5 = ssub.s32 1, %s3
  %s6 = scalar_select 0, %s5, %s3
  // Predicated region
  $region2: #{tpu_custom_call.1} parent=0 // pred_check
    _
  $region3: #{tpu_custom_call.1} parent=0 // pred_check_branch
    %8 = sbr.rel (0) target = $region5
  $region4: #{tpu_custom_call.1} parent=0 // pred_region
    _
  $region5: #{tpu_custom_call.1} parent=0 // pred_fallthru
    _
  // Predicated region
  $region6: #{tpu_custom_call.1} parent=0 // pred_check
    _
  $region7: #{tpu_custom_call.1} parent=0 // pred_check_branch
    %10 = sbr.rel (0) target = $region9
  $region8: #{tpu_custom_call.1} parent=0 // pred_region
    _
  $region9: #{tpu_custom_call.1} parent=0 // pred_fallthru
    _
  %v11 = vld [vmem:[%s0] sm:$0xff]
  %v12 = vld [vmem:[%s0 + $0x8] sm:$0xff]
  %v13 = vld [vmem:[%s0 + $0x10] sm:$0xff]
  %v14 = vld [vmem:[%s0 + $0x18] sm:$0xff]
  %v15 = vld [vmem:[%s0 + $0x20] sm:$0xff]
  %v16 = vld [vmem:[%s0 + $0x28] sm:$0xff]
  %v17 = vld [vmem:[%s0 + $0x30] sm:$0xff]
  %v18 = vld [vmem:[%s0 + $0x38] sm:$0xff]
  %v19 = vld [vmem:[%s0 + $0x40] sm:$0xff]
  %v20 = vld [vmem:[%s0 + $0x48] sm:$0xff]
  %v21 = vld [vmem:[%s0 + $0x50] sm:$0xff]
  %v22 = vld [vmem:[%s0 + $0x58] sm:$0xff]
  %v23 = vld [vmem:[%s0 + $0x60] sm:$0xff]
  %v24 = vld [vmem:[%s0 + $0x68] sm:$0xff]
  %v25 = vld [vmem:[%s0 + $0x70] sm:$0xff]
  %v26 = vld [vmem:[%s0 + $0x78] sm:$0xff]
  %v27 = vld [vmem:[%s0 + $0x80] sm:$0xff]
  %v28 = vld [vmem:[%s0 + $0x88] sm:$0xff]
  %v29 = vld [vmem:[%s0 + $0x90] sm:$0xff]
  %v30 = vld [vmem:[%s0 + $0x98] sm:$0xff]
  %v31 = vld [vmem:[%s0 + $0xa0] sm:$0xff]
  %v32 = vld [vmem:[%s0 + $0xa8] sm:$0xff]
  %v33 = vld [vmem:[%s0 + $0xb0] sm:$0xff]
  %v34 = vld [vmem:[%s0 + $0xb8] sm:$0xff]
  %v35 = vld [vmem:[%s0 + $0xc0] sm:$0xff]
  %v36 = vld [vmem:[%s0 + $0xc8] sm:$0xff]
  %v37 = vld [vmem:[%s0 + $0xd0] sm:$0xff]
  %v38 = vld [vmem:[%s0 + $0xd8] sm:$0xff]
  %v39 = vld [vmem:[%s0 + $0xe0] sm:$0xff]
  %v40 = vld [vmem:[%s0 + $0xe8] sm:$0xff]
  %v41 = vld [vmem:[%s0 + $0xf0] sm:$0xff]
  %v42 = vld [vmem:[%s0 + $0xf8] sm:$0xff]
  %v43 = vld [vmem:[%s1] sm:$0xff]
  %v44 = vld [vmem:[%s1 + $0x8] sm:$0xff]
  %v45 = vld [vmem:[%s1 + $0x10] sm:$0xff]
  %v46 = vld [vmem:[%s1 + $0x18] sm:$0xff]
  %vm47 = vcmask 261120
  %v49 = vsel %vm47, %v11, 0
  %v52 = vsel %vm47, %v12, 0
  %v55 = vsel %vm47, %v13, 0
  %v58 = vsel %vm47, %v14, 0
  %v61 = vsel %vm47, %v15, 0
  %v64 = vsel %vm47, %v16, 0
  %v67 = vsel %vm47, %v17, 0
  %v70 = vsel %vm47, %v18, 0
  %v73 = vsel %vm47, %v19, 0
  %v76 = vsel %vm47, %v20, 0
  %v79 = vsel %vm47, %v21, 0
  %v82 = vsel %vm47, %v22, 0
  %v85 = vsel %vm47, %v23, 0
  %v88 = vsel %vm47, %v24, 0
  %v91 = vsel %vm47, %v25, 0
  %v94 = vsel %vm47, %v26, 0
  %v97 = vsel %vm47, %v27, 0
  %v100 = vsel %vm47, %v28, 0
  %v103 = vsel %vm47, %v29, 0
  %v106 = vsel %vm47, %v30, 0
  %v109 = vsel %vm47, %v31, 0
  %v112 = vsel %vm47, %v32, 0
  %v115 = vsel %vm47, %v33, 0
  %v118 = vsel %vm47, %v34, 0
  %v121 = vsel %vm47, %v35, 0
  %v124 = vsel %vm47, %v36, 0
  %v127 = vsel %vm47, %v37, 0
  %v130 = vsel %vm47, %v38, 0
  %v133 = vsel %vm47, %v39, 0
  %v136 = vsel %vm47, %v40, 0
  %v139 = vsel %vm47, %v41, 0
  %v142 = vsel %vm47, %v42, 0
  %144 = vmatpush.msra.mxu0 0.0
  %145 = vmatpush.msra.mxu0 0.0
  %146 = vmatpush.msra.mxu0 0.0
  %147 = vmatpush.msra.mxu0 0.0
  %148 = vmatpush.msra.mxu0 0.0
  %149 = vmatpush.msra.mxu0 0.0
  %150 = vmatpush.msra.mxu0 0.0
  %151 = vmatpush.msra.mxu0 0.0
  %152 = vmatpush.msra.mxu0 0.0
  %153 = vmatpush.msra.mxu0 0.0
  %154 = vmatpush.msra.mxu0 0.0
  %155 = vmatpush.msra.mxu0 0.0
  %156 = vmatpush.msra.mxu0 %v46
  %157 = vmatpush.msra.mxu0 %v45
  %158 = vmatpush.msra.mxu0 %v44
  %159 = vmatpush.msra.mxu0 %v43
  %160 = vmatmul.f32.gmra.mxu0 %v49
  %v161 = vpop.f32.mrf.mxu0
  %v162 = vadd.f32 0.0, %v161
  %163 = vmatmul.f32.gmra.mxu0 %v52
  %v164 = vpop.f32.mrf.mxu0
  %v165 = vadd.f32 0.0, %v164
  %166 = vmatmul.f32.gmra.mxu0 %v55
  %v167 = vpop.f32.mrf.mxu0
  %v168 = vadd.f32 0.0, %v167
  %169 = vmatmul.f32.gmra.mxu0 %v58
  %v170 = vpop.f32.mrf.mxu0
  %v171 = vadd.f32 0.0, %v170
  %172 = vmatmul.f32.gmra.mxu0 %v61
  %v173 = vpop.f32.mrf.mxu0
  %v174 = vadd.f32 0.0, %v173
  %175 = vmatmul.f32.gmra.mxu0 %v64
  %v176 = vpop.f32.mrf.mxu0
  %v177 = vadd.f32 0.0, %v176
  %178 = vmatmul.f32.gmra.mxu0 %v67
  %v179 = vpop.f32.mrf.mxu0
  %v180 = vadd.f32 0.0, %v179
  %181 = vmatmul.f32.gmra.mxu0 %v70
  %v182 = vpop.f32.mrf.mxu0
  %v183 = vadd.f32 0.0, %v182
  %184 = vmatmul.f32.gmra.mxu0 %v73
  %v185 = vpop.f32.mrf.mxu0
  %v186 = vadd.f32 0.0, %v185
  %187 = vmatmul.f32.gmra.mxu0 %v76
  %v188 = vpop.f32.mrf.mxu0
  %v189 = vadd.f32 0.0, %v188
  %190 = vmatmul.f32.gmra.mxu0 %v79
  %v191 = vpop.f32.mrf.mxu0
  %v192 = vadd.f32 0.0, %v191
  %193 = vmatmul.f32.gmra.mxu0 %v82
  %v194 = vpop.f32.mrf.mxu0
  %v195 = vadd.f32 0.0, %v194
  %196 = vmatmul.f32.gmra.mxu0 %v85
  %v197 = vpop.f32.mrf.mxu0
  %v198 = vadd.f32 0.0, %v197
  %199 = vmatmul.f32.gmra.mxu0 %v88
  %v200 = vpop.f32.mrf.mxu0
  %v201 = vadd.f32 0.0, %v200
  %202 = vmatmul.f32.gmra.mxu0 %v91
  %v203 = vpop.f32.mrf.mxu0
  %v204 = vadd.f32 0.0, %v203
  %205 = vmatmul.f32.gmra.mxu0 %v94
  %v206 = vpop.f32.mrf.mxu0
  %v207 = vadd.f32 0.0, %v206
  %208 = vmatmul.f32.gmra.mxu0 %v97
  %v209 = vpop.f32.mrf.mxu0
  %v210 = vadd.f32 0.0, %v209
  %211 = vmatmul.f32.gmra.mxu0 %v100
  %v212 = vpop.f32.mrf.mxu0
  %v213 = vadd.f32 0.0, %v212
  %214 = vmatmul.f32.gmra.mxu0 %v103
  %v215 = vpop.f32.mrf.mxu0
  %v216 = vadd.f32 0.0, %v215
  %217 = vmatmul.f32.gmra.mxu0 %v106
  %v218 = vpop.f32.mrf.mxu0
  %v219 = vadd.f32 0.0, %v218
  %220 = vmatmul.f32.gmra.mxu0 %v109
  %v221 = vpop.f32.mrf.mxu0
  %v222 = vadd.f32 0.0, %v221
  %223 = vmatmul.f32.gmra.mxu0 %v112
  %v224 = vpop.f32.mrf.mxu0
  %v225 = vadd.f32 0.0, %v224
  %226 = vmatmul.f32.gmra.mxu0 %v115
  %v227 = vpop.f32.mrf.mxu0
  %v228 = vadd.f32 0.0, %v227
  %229 = vmatmul.f32.gmra.mxu0 %v118
  %v230 = vpop.f32.mrf.mxu0
  %v231 = vadd.f32 0.0, %v230
  %232 = vmatmul.f32.gmra.mxu0 %v121
  %v233 = vpop.f32.mrf.mxu0
  %v234 = vadd.f32 0.0, %v233
  %235 = vmatmul.f32.gmra.mxu0 %v124
  %v236 = vpop.f32.mrf.mxu0
  %v237 = vadd.f32 0.0, %v236
  %238 = vmatmul.f32.gmra.mxu0 %v127
  %v239 = vpop.f32.mrf.mxu0
  %v240 = vadd.f32 0.0, %v239
  %241 = vmatmul.f32.gmra.mxu0 %v130
  %v242 = vpop.f32.mrf.mxu0
  %v243 = vadd.f32 0.0, %v242
  %244 = vmatmul.f32.gmra.mxu0 %v133
  %v245 = vpop.f32.mrf.mxu0
  %v246 = vadd.f32 0.0, %v245
  %247 = vmatmul.f32.gmra.mxu0 %v136
  %v248 = vpop.f32.mrf.mxu0
  %v249 = vadd.f32 0.0, %v248
  %250 = vmatmul.f32.gmra.mxu0 %v139
  %v251 = vpop.f32.mrf.mxu0
  %v252 = vadd.f32 0.0, %v251
  %253 = vmatmul.f32.gmra.mxu0 %v142
  %v254 = vpop.f32.mrf.mxu0
  %v255 = vadd.f32 0.0, %v254
  %256 = vdwg.mxu0
  %vm257 = vcmask 31744
  %v258 = vsel %vm257, %v162, 0.0
  %v259 = vrot.slane %v258, 4
  %v260 = vadd.f32 %v258, %v259
  %v261 = vrot.slane %v260, 2
  %v262 = vadd.f32 %v260, %v261
  %v263 = vrot.slane %v262, 1
  %v264 = vadd.f32 %v262, %v263
  %v265 = vsel %vm257, %v165, 0.0
  %v266 = vrot.slane %v265, 4
  %v267 = vadd.f32 %v265, %v266
  %v268 = vrot.slane %v267, 2
  %v269 = vadd.f32 %v267, %v268
  %v270 = vrot.slane %v269, 1
  %v271 = vadd.f32 %v269, %v270
  %v272 = vsel %vm257, %v168, 0.0
  %v273 = vrot.slane %v272, 4
  %v274 = vadd.f32 %v272, %v273
  %v275 = vrot.slane %v274, 2
  %v276 = vadd.f32 %v274, %v275
  %v277 = vrot.slane %v276, 1
  %v278 = vadd.f32 %v276, %v277
  %v279 = vsel %vm257, %v171, 0.0
  %v280 = vrot.slane %v279, 4
  %v281 = vadd.f32 %v279, %v280
  %v282 = vrot.slane %v281, 2
  %v283 = vadd.f32 %v281, %v282
  %v284 = vrot.slane %v283, 1
  %v285 = vadd.f32 %v283, %v284
  %v286 = vsel %vm257, %v174, 0.0
  %v287 = vrot.slane %v286, 4
  %v288 = vadd.f32 %v286, %v287
  %v289 = vrot.slane %v288, 2
  %v290 = vadd.f32 %v288, %v289
  %v291 = vrot.slane %v290, 1
  %v292 = vadd.f32 %v290, %v291
  %v293 = vsel %vm257, %v177, 0.0
  %v294 = vrot.slane %v293, 4
  %v295 = vadd.f32 %v293, %v294
  %v296 = vrot.slane %v295, 2
  %v297 = vadd.f32 %v295, %v296
  %v298 = vrot.slane %v297, 1
  %v299 = vadd.f32 %v297, %v298
  %v300 = vsel %vm257, %v180, 0.0
  %v301 = vrot.slane %v300, 4
  %v302 = vadd.f32 %v300, %v301
  %v303 = vrot.slane %v302, 2
  %v304 = vadd.f32 %v302, %v303
  %v305 = vrot.slane %v304, 1
  %v306 = vadd.f32 %v304, %v305
  %v307 = vsel %vm257, %v183, 0.0
  %v308 = vrot.slane %v307, 4
  %v309 = vadd.f32 %v307, %v308
  %v310 = vrot.slane %v309, 2
  %v311 = vadd.f32 %v309, %v310
  %v312 = vrot.slane %v311, 1
  %v313 = vadd.f32 %v311, %v312
  %v314 = vsel %vm257, %v186, 0.0
  %v315 = vrot.slane %v314, 4
  %v316 = vadd.f32 %v314, %v315
  %v317 = vrot.slane %v316, 2
  %v318 = vadd.f32 %v316, %v317
  %v319 = vrot.slane %v318, 1
  %v320 = vadd.f32 %v318, %v319
  %v321 = vsel %vm257, %v189, 0.0
  %v322 = vrot.slane %v321, 4
  %v323 = vadd.f32 %v321, %v322
  %v324 = vrot.slane %v323, 2
  %v325 = vadd.f32 %v323, %v324
  %v326 = vrot.slane %v325, 1
  %v327 = vadd.f32 %v325, %v326
  %v328 = vsel %vm257, %v192, 0.0
  %v329 = vrot.slane %v328, 4
  %v330 = vadd.f32 %v328, %v329
  %v331 = vrot.slane %v330, 2
  %v332 = vadd.f32 %v330, %v331
  %v333 = vrot.slane %v332, 1
  %v334 = vadd.f32 %v332, %v333
  %v335 = vsel %vm257, %v195, 0.0
  %v336 = vrot.slane %v335, 4
  %v337 = vadd.f32 %v335, %v336
  %v338 = vrot.slane %v337, 2
  %v339 = vadd.f32 %v337, %v338
  %v340 = vrot.slane %v339, 1
  %v341 = vadd.f32 %v339, %v340
  %v342 = vsel %vm257, %v198, 0.0
  %v343 = vrot.slane %v342, 4
  %v344 = vadd.f32 %v342, %v343
  %v345 = vrot.slane %v344, 2
  %v346 = vadd.f32 %v344, %v345
  %v347 = vrot.slane %v346, 1
  %v348 = vadd.f32 %v346, %v347
  %v349 = vsel %vm257, %v201, 0.0
  %v350 = vrot.slane %v349, 4
  %v351 = vadd.f32 %v349, %v350
  %v352 = vrot.slane %v351, 2
  %v353 = vadd.f32 %v351, %v352
  %v354 = vrot.slane %v353, 1
  %v355 = vadd.f32 %v353, %v354
  %v356 = vsel %vm257, %v204, 0.0
  %v357 = vrot.slane %v356, 4
  %v358 = vadd.f32 %v356, %v357
  %v359 = vrot.slane %v358, 2
  %v360 = vadd.f32 %v358, %v359
  %v361 = vrot.slane %v360, 1
  %v362 = vadd.f32 %v360, %v361
  %v363 = vsel %vm257, %v207, 0.0
  %v364 = vrot.slane %v363, 4
  %v365 = vadd.f32 %v363, %v364
  %v366 = vrot.slane %v365, 2
  %v367 = vadd.f32 %v365, %v366
  %v368 = vrot.slane %v367, 1
  %v369 = vadd.f32 %v367, %v368
  %v370 = vsel %vm257, %v210, 0.0
  %v371 = vrot.slane %v370, 4
  %v372 = vadd.f32 %v370, %v371
  %v373 = vrot.slane %v372, 2
  %v374 = vadd.f32 %v372, %v373
  %v375 = vrot.slane %v374, 1
  %v376 = vadd.f32 %v374, %v375
  %v377 = vsel %vm257, %v213, 0.0
  %v378 = vrot.slane %v377, 4
  %v379 = vadd.f32 %v377, %v378
  %v380 = vrot.slane %v379, 2
  %v381 = vadd.f32 %v379, %v380
  %v382 = vrot.slane %v381, 1
  %v383 = vadd.f32 %v381, %v382
  %v384 = vsel %vm257, %v216, 0.0
  %v385 = vrot.slane %v384, 4
  %v386 = vadd.f32 %v384, %v385
  %v387 = vrot.slane %v386, 2
  %v388 = vadd.f32 %v386, %v387
  %v389 = vrot.slane %v388, 1
  %v390 = vadd.f32 %v388, %v389
  %v391 = vsel %vm257, %v219, 0.0
  %v392 = vrot.slane %v391, 4
  %v393 = vadd.f32 %v391, %v392
  %v394 = vrot.slane %v393, 2
  %v395 = vadd.f32 %v393, %v394
  %v396 = vrot.slane %v395, 1
  %v397 = vadd.f32 %v395, %v396
  %v398 = vsel %vm257, %v222, 0.0
  %v399 = vrot.slane %v398, 4
  %v400 = vadd.f32 %v398, %v399
  %v401 = vrot.slane %v400, 2
  %v402 = vadd.f32 %v400, %v401
  %v403 = vrot.slane %v402, 1
  %v404 = vadd.f32 %v402, %v403
  %v405 = vsel %vm257, %v225, 0.0
  %v406 = vrot.slane %v405, 4
  %v407 = vadd.f32 %v405, %v406
  %v408 = vrot.slane %v407, 2
  %v409 = vadd.f32 %v407, %v408
  %v410 = vrot.slane %v409, 1
  %v411 = vadd.f32 %v409, %v410
  %v412 = vsel %vm257, %v228, 0.0
  %v413 = vrot.slane %v412, 4
  %v414 = vadd.f32 %v412, %v413
  %v415 = vrot.slane %v414, 2
  %v416 = vadd.f32 %v414, %v415
  %v417 = vrot.slane %v416, 1
  %v418 = vadd.f32 %v416, %v417
  %v419 = vsel %vm257, %v231, 0.0
  %v420 = vrot.slane %v419, 4
  %v421 = vadd.f32 %v419, %v420
  %v422 = vrot.slane %v421, 2
  %v423 = vadd.f32 %v421, %v422
  %v424 = vrot.slane %v423, 1
  %v425 = vadd.f32 %v423, %v424
  %v426 = vsel %vm257, %v234, 0.0
  %v427 = vrot.slane %v426, 4
  %v428 = vadd.f32 %v426, %v427
  %v429 = vrot.slane %v428, 2
  %v430 = vadd.f32 %v428, %v429
  %v431 = vrot.slane %v430, 1
  %v432 = vadd.f32 %v430, %v431
  %v433 = vsel %vm257, %v237, 0.0
  %v434 = vrot.slane %v433, 4
  %v435 = vadd.f32 %v433, %v434
  %v436 = vrot.slane %v435, 2
  %v437 = vadd.f32 %v435, %v436
  %v438 = vrot.slane %v437, 1
  %v439 = vadd.f32 %v437, %v438
  %v440 = vsel %vm257, %v240, 0.0
  %v441 = vrot.slane %v440, 4
  %v442 = vadd.f32 %v440, %v441
  %v443 = vrot.slane %v442, 2
  %v444 = vadd.f32 %v442, %v443
  %v445 = vrot.slane %v444, 1
  %v446 = vadd.f32 %v444, %v445
  %v447 = vsel %vm257, %v243, 0.0
  %v448 = vrot.slane %v447, 4
  %v449 = vadd.f32 %v447, %v448
  %v450 = vrot.slane %v449, 2
  %v451 = vadd.f32 %v449, %v450
  %v452 = vrot.slane %v451, 1
  %v453 = vadd.f32 %v451, %v452
  %v454 = vsel %vm257, %v246, 0.0
  %v455 = vrot.slane %v454, 4
  %v456 = vadd.f32 %v454, %v455
  %v457 = vrot.slane %v456, 2
  %v458 = vadd.f32 %v456, %v457
  %v459 = vrot.slane %v458, 1
  %v460 = vadd.f32 %v458, %v459
  %v461 = vsel %vm257, %v249, 0.0
  %v462 = vrot.slane %v461, 4
  %v463 = vadd.f32 %v461, %v462
  %v464 = vrot.slane %v463, 2
  %v465 = vadd.f32 %v463, %v464
  %v466 = vrot.slane %v465, 1
  %v467 = vadd.f32 %v465, %v466
  %v468 = vsel %vm257, %v252, 0.0
  %v469 = vrot.slane %v468, 4
  %v470 = vadd.f32 %v468, %v469
  %v471 = vrot.slane %v470, 2
  %v472 = vadd.f32 %v470, %v471
  %v473 = vrot.slane %v472, 1
  %v474 = vadd.f32 %v472, %v473
  %v475 = vsel %vm257, %v255, 0.0
  %v476 = vrot.slane %v475, 4
  %v477 = vadd.f32 %v475, %v476
  %v478 = vrot.slane %v477, 2
  %v479 = vadd.f32 %v477, %v478
  %v480 = vrot.slane %v479, 1
  %v481 = vadd.f32 %v479, %v480
  %vm514 = vcmask 1041409
  %v515 = vsel %vm514, %v271, %v264
  %vm516 = vcmask 1042434
  %v517 = vsel %vm516, %v278, %v515
  %vm518 = vcmask 1043459
  %v519 = vsel %vm518, %v285, %v517
  %vm520 = vcmask 1044484
  %v521 = vsel %vm520, %v292, %v519
  %vm522 = vcmask 1045509
  %v523 = vsel %vm522, %v299, %v521
  %vm524 = vcmask 1046534
  %v525 = vsel %vm524, %v306, %v523
  %vm526 = vcmask 1047559
  %v527 = vsel %vm526, %v313, %v525
  %v528 = vsel %vm514, %v327, %v320
  %v529 = vsel %vm516, %v334, %v528
  %v530 = vsel %vm518, %v341, %v529
  %v531 = vsel %vm520, %v348, %v530
  %v532 = vsel %vm522, %v355, %v531
  %v533 = vsel %vm524, %v362, %v532
  %v534 = vsel %vm526, %v369, %v533
  %v535 = vsel %vm514, %v383, %v376
  %v536 = vsel %vm516, %v390, %v535
  %v537 = vsel %vm518, %v397, %v536
  %v538 = vsel %vm520, %v404, %v537
  %v539 = vsel %vm522, %v411, %v538
  %v540 = vsel %vm524, %v418, %v539
  %v541 = vsel %vm526, %v425, %v540
  %v542 = vsel %vm514, %v439, %v432
  %v543 = vsel %vm516, %v446, %v542
  %v544 = vsel %vm518, %v453, %v543
  %v545 = vsel %vm520, %v460, %v544
  %v546 = vsel %vm522, %v467, %v545
  %v547 = vsel %vm524, %v474, %v546
  %v548 = vsel %vm526, %v481, %v547
  %553 = vst.msk [vmem:[%s2] sm:$0xff] %vm257, %v527
  %554 = vst.msk [vmem:[%s2 + $0x8] sm:$0xff] %vm257, %v534
  %555 = vst.msk [vmem:[%s2 + $0x10] sm:$0xff] %vm257, %v541
  %556 = vst.msk [vmem:[%s2 + $0x18] sm:$0xff] %vm257, %v548
  // Predicated region
  $region10: #{tpu_custom_call.1} parent=0 // pred_check
    _
  $region11: #{tpu_custom_call.1} parent=0 // pred_check_branch
    %558 = sbr.rel (0) target = $region13
  $region12: #{tpu_custom_call.1} parent=0 // pred_region
    _
  $region13: #{tpu_custom_call.1} parent=0 // pred_fallthru
    _
  // Predicated region
  $region14: #{tpu_custom_call.1} parent=0 // pred_check
    _
  $region15: #{tpu_custom_call.1} parent=0 // pred_check_branch
    %560 = sbr.rel (0) target = $region17
  $region16: #{tpu_custom_call.1} parent=0 // pred_region
    _
  $region17: #{tpu_custom_call.1} parent=0 // pred_fallthru
    _

</llo_original>
